<compile_context>
chip_gen: v5e
topology: v5e:2x2
jax: 0.10.0
libtpu: 0.0.40
codegen_flags: <defaults>
</compile_context>

<pallas_src>
from functools import partial

import jax
import jax.numpy as jnp
from jax.experimental import pallas as pl
from jax.experimental.pallas import tpu as pltpu


def _round_up(x, m):
    return ((x + m - 1) // m) * m


def _logits_kernel(x_ref, w_ref, b_ref, o_ref):
    # x: (TM, H) bf16, w: (H, TN) bf16, b: (1, TN) f32 -> o: (TM, TN) f32
    o_ref[...] = (
        jnp.dot(x_ref[...], w_ref[...], preferred_element_type=jnp.float32)
        + b_ref[...]
    )


def _softmax_kernel(x_ref, w_ref, b_ref, o_ref, m_ref, l_ref, *, tn):
    # Streaming (online) softmax over the tiled vocab axis.
    # o_ref is the full (TM, Vp) row block, resident across the V grid axis.
    vj = pl.program_id(1)

    @pl.when(vj == 0)
    def _():
        m_ref[...] = jnp.full_like(m_ref, -jnp.inf)
        l_ref[...] = jnp.zeros_like(l_ref)

    s = (
        jnp.dot(x_ref[...], w_ref[...], preferred_element_type=jnp.float32)
        + b_ref[...]
    )  # (TM, TN) f32 logits for this vocab tile

    m_old = m_ref[...]
    m_new = jnp.maximum(m_old, jnp.max(s, axis=-1, keepdims=True))
    l_ref[...] = l_ref[...] * jnp.exp(m_old - m_new) + jnp.sum(
        jnp.exp(s - m_new), axis=-1, keepdims=True
    )
    m_ref[...] = m_new

    # Stage raw logits into the resident output block (lane-aligned column).
    col = pl.multiple_of(vj * tn, 128)
    o_ref[:, pl.ds(col, tn)] = s

    @pl.when(vj == pl.num_programs(1) - 1)
    def _():
        p = jnp.exp(o_ref[...] - m_ref[...])
        # Exact reciprocal: rows sum to 1 up to f32 roundoff.
        o_ref[...] = p * pl.reciprocal(l_ref[...], approx=False)


def mlm_head(x, weight, bias, *, output_probabilities=False,
             tm_max=256, tn_max=2048):
    """Fused MLM head.

    x      : (..., H) float  — activations (any leading dims).
    weight : (V, H)   float  — PyTorch nn.Linear layout.
    bias   : (V,)     float.
    Returns (..., V) float32 logits or softmax probabilities.
    """
    *lead, H = x.shape
    V = weight.shape[0]
    M = 1
    for d in lead:
        M *= d
    x2 = x.reshape(M, H)

    # ---- tile sizing -------------------------------------------------------
    TM = tm_max if M >= tm_max else _round_up(max(M, 1), 8)
    Mp = _round_up(M, TM)
    TN = _round_up(min(tn_max, _round_up(V, 128)), 128)
    Vp = _round_up(V, TN)

    # ---- host-side operand prep (bf16 weights/activations, padded) ---------
    # TODO(synk): in a real model cast/pad the weight once at load time, not per call.
    NEG = jnp.float32(-1e30)  # padded vocab columns -> effectively -inf logits
    x_p = jnp.zeros((Mp, H), jnp.bfloat16).at[:M].set(x2.astype(jnp.bfloat16))
    w_p = jnp.zeros((H, Vp), jnp.bfloat16).at[:, :V].set(
        weight.T.astype(jnp.bfloat16))
    b_p = jnp.full((1, Vp), NEG, jnp.float32).at[0, :V].set(
        bias.astype(jnp.float32))

    grid = (Mp // TM, Vp // TN)
    in_specs = [
        pl.BlockSpec((TM, H), lambda i, j: (i, 0)),   # activation tile (resident over V)
        pl.BlockSpec((H, TN), lambda i, j: (0, j)),   # streamed bf16 weight tile
        pl.BlockSpec((1, TN), lambda i, j: (0, j)),   # bias tile
    ]

    if output_probabilities:
        kernel = partial(_softmax_kernel, tn=TN)
        out_specs = pl.BlockSpec((TM, Vp), lambda i, j: (i, 0))  # V-resident row block
        scratch = [pltpu.VMEM((TM, 1), jnp.float32),   # running max
                   pltpu.VMEM((TM, 1), jnp.float32)]   # running sum
        transcendentals = Mp * Vp
    else:
        kernel = _logits_kernel
        out_specs = pl.BlockSpec((TM, TN), lambda i, j: (i, j))
        scratch = []
        transcendentals = 0

    cost = pl.CostEstimate(
        flops=2 * Mp * H * Vp,
        transcendentals=transcendentals,
        bytes_accessed=x_p.size * 2 + w_p.size * 2 + b_p.size * 4 + Mp * Vp * 4,
    )

    out = pl.pallas_call(
        kernel,
        out_shape=jax.ShapeDtypeStruct((Mp, Vp), jnp.float32),
        grid_spec=pltpu.PrefetchScalarGridSpec(
            num_scalar_prefetch=0,
            grid=grid,
            in_specs=in_specs,
            out_specs=out_specs,
            scratch_shapes=scratch,
        ),
        compiler_params=pltpu.CompilerParams(
            dimension_semantics=("parallel", "arbitrary"),
            vmem_limit_bytes=48 * 1024 * 1024,   # headroom under v7x's 64 MiB
        ),
        cost_estimate=cost,
    )(x_p, w_p, b_p)

    return out[:M, :V].reshape(*lead, V)


if __name__ == "__main__":
    # Small shapes consistent with the module; V deliberately NOT a multiple of
    # 128 to exercise vocab padding/masking, tn_max=256 forces multiple vocab
    # tiles to exercise the streaming softmax.
    B, S, H, V = 2, 8, 32, 1000
    key = jax.random.PRNGKey(0)
    kx, kw, kb = jax.random.split(key, 3)
    x = (0.02 * jax.random.normal(kx, (B, S, H))).astype(jnp.float32)
    weight = (0.02 * jax.random.normal(kw, (V, H))).astype(jnp.float32)  # (V, H) torch layout
    bias = (0.02 * jax.random.normal(kb, (V,))).astype(jnp.float32)

    ref_logits = jnp.einsum("bsh,vh->bsv", x, weight) + bias
    ref_probs = jax.nn.softmax(ref_logits, axis=-1)

    # Default MLMHead: raw logits.
    logits = jax.block_until_ready(
        mlm_head(x, weight, bias, output_probabilities=False, tn_max=256))
    assert logits.shape == (B, S, V) and logits.dtype == jnp.float32
    assert bool(jnp.all(jnp.isfinite(logits)))
    assert bool(jnp.max(jnp.abs(logits - ref_logits)) < 2e-3)

    # output_probabilities=True: fused streaming softmax.
    probs = jax.block_until_ready(
        mlm_head(x, weight, bias, output_probabilities=True, tn_max=256))
    assert probs.shape == (B, S, V) and bool(jnp.all(jnp.isfinite(probs)))
    assert bool(jnp.max(jnp.abs(jnp.sum(probs, axis=-1) - 1.0)) < 1e-3)
    assert bool(jnp.max(jnp.abs(probs - ref_probs)) < 1e-4)

    print("KERNEL_OK")
</pallas_src>

<mosaic_0001>
module attributes {stable_mosaic.version = 11 : i64} {
  func.func @_logits_kernel(%arg0: i32, %arg1: i32, %arg2: memref<16x32xbf16, #tpu.memory_space<vmem>>, %arg3: memref<32x256xbf16, #tpu.memory_space<vmem>>, %arg4: memref<1x256xf32, #tpu.memory_space<vmem>>, %arg5: memref<16x256xf32, #tpu.memory_space<vmem>>) attributes {dimension_semantics = [#tpu.dimension_semantics<parallel>, #tpu.dimension_semantics<arbitrary>], iteration_bounds = array<i64: 1, 4>, scalar_prefetch = 0 : i64, scratch_operands = 0 : i64, tpu.core_type = #tpu.core_type<tc>, window_params = [{transform_indices = @transform_0, window_bounds = array<i64: 16, 32>}, {transform_indices = @transform_1, window_bounds = array<i64: 32, 256>}, {transform_indices = @transform_2, window_bounds = array<i64: 1, 256>}, {transform_indices = @transform_3, window_bounds = array<i64: 16, 256>}]} {
    %c0 = arith.constant 0 : index
    %c0_0 = arith.constant 0 : index
    %0 = vector.load %arg2[%c0, %c0_0] : memref<16x32xbf16, #tpu.memory_space<vmem>>, vector<16x32xbf16>
    %c0_1 = arith.constant 0 : index
    %c0_2 = arith.constant 0 : index
    %1 = vector.load %arg3[%c0_1, %c0_2] : memref<32x256xbf16, #tpu.memory_space<vmem>>, vector<32x256xbf16>
    %cst = arith.constant dense<0.000000e+00> : vector<16x256xf32>
    %2 = tpu.matmul %0, %1, %cst {dimension_numbers = #tpu.dot_dimension_numbers<[1], [0], [0], [1], [0, 0, 1, 1], [], []>} : vector<16x32xbf16>, vector<32x256xbf16>, vector<16x256xf32> -> vector<16x256xf32>
    %c0_3 = arith.constant 0 : index
    %c0_4 = arith.constant 0 : index
    %3 = vector.load %arg4[%c0_3, %c0_4] : memref<1x256xf32, #tpu.memory_space<vmem>>, vector<1x256xf32>
    %4 = vector.broadcast %3 : vector<1x256xf32> to vector<16x256xf32>
    %5 = arith.addf %2, %4 : vector<16x256xf32>
    %c0_5 = arith.constant 0 : index
    %c0_6 = arith.constant 0 : index
    %6 = vector.load %arg5[%c0_5, %c0_6] : memref<16x256xf32, #tpu.memory_space<vmem>>, vector<16x256xf32>
    tpu.vector_store %arg5[%c0_5, %c0_6], %5 {strides = array<i32>} : memref<16x256xf32, #tpu.memory_space<vmem>>, vector<16x256xf32>,
    return
  }
  func.func @transform_0(%arg0: i32, %arg1: i32) -> (i32, i32) {
    %c0_i32 = arith.constant 0 : i32
    %c0_i32_0 = arith.constant 0 : i32
    return %arg0, %c0_i32 : i32, i32
  }
  func.func @transform_1(%arg0: i32, %arg1: i32) -> (i32, i32) {
    %c0_i32 = arith.constant 0 : i32
    %c0_i32_0 = arith.constant 0 : i32
    return %c0_i32, %arg1 : i32, i32
  }
  func.func @transform_2(%arg0: i32, %arg1: i32) -> (i32, i32) {
    %c0_i32 = arith.constant 0 : i32
    %c0_i32_0 = arith.constant 0 : i32
    return %c0_i32, %arg1 : i32, i32
  }
  func.func @transform_3(%arg0: i32, %arg1: i32) -> (i32, i32) {
    %c0_i32 = arith.constant 0 : i32
    return %arg0, %arg1 : i32, i32
  }
}

</mosaic_0001>

<llo_original>
// kernel: tpu_custom_call.1
$region0: #{tpu_custom_call.1}
  #allocation0 [shape = 'u32[]', space=smem, size = 0x4, offset = 0x4, fixed_abs, tag = 'smem constant byte address 0x4 - core index']
  #allocation1 [shape = 'u32[72,128]{1,0:T(1,128)}', space=vmem, size = 0x9000, scoped, tag = 'internal scratch']
  %s0 = inlined_call_operand.hbm [shape: bf16[16,32], index: 0, kind: input, shape index: {}]
  %s1 = inlined_call_operand.hbm [shape: bf16[32,1024], index: 1, kind: input, shape index: {}]
  %s2 = inlined_call_operand.hbm [shape: f32[1,1024], index: 2, kind: input, shape index: {}]
  %s3 = inlined_call_operand.hbm [shape: f32[16,1024], index: 3, kind: output, shape index: {}]
  %s4 = sld [smem:[#allocation0]]
  $region57: #{tpu_custom_call.1} parent=0
    _
  %s6 = ssub.s32 1, %s4
  %s7 = scalar_select 0, %s6, %s4
  $region1: #{tpu_custom_call.1} parent=0
    #allocation2 [shape = 'u8[4096]{0}', space=vmem, size = 0x1000, scoped, tag = 'input window, operand 0, single buffered']
    #allocation3 [shape = 's32[2]{0}', space=sflag, size = 0x8, scoped, tag = 'scoped memory for tpu_custom_call.1']
    #allocation4 [shape = 's32[2]{0}', space=sflag, size = 0x8, scoped, tag = 'scoped memory for tpu_custom_call.1']
    #allocation5 [shape = 'u8[32768]{0}', space=vmem, size = 0x8000, scoped, tag = 'input window, operand 1']
    #allocation6 [shape = 's32[2]{0}', space=sflag, size = 0x8, scoped, tag = 'scoped memory for tpu_custom_call.1']
    #allocation7 [shape = 'u8[2048]{0}', space=vmem, size = 0x800, scoped, tag = 'input window, operand 2']
    #allocation8 [shape = 'u8[32768]{0}', space=vmem, size = 0x8000, scoped, tag = 'output window, operand 0']
    %8 = vsyncpa [#allocation3], 0
    %9 = vsyncpa [#allocation6], 0
    %s10 = scalar_lea.sflag [#allocation6], 1
    %11 = vsyncpa %s10, 0
    %12 = vsyncpa [#allocation4], 0
    %s13 = scalar_lea.sflag [#allocation4], 1
    %14 = vsyncpa %s13, 0
    loop: start=0, step=1, limit=6
    $region2: #{tpu_custom_call.1} parent=1 // loop_pre_header
      _
    $region3: #{tpu_custom_call.1} parent=1 // loop_header
      %s16 = sphi 0, %s20
      %p17 = scmp.ge.s32.totalorder %s16, 6
      %s23 = sphi 0, %s35
      %s24 = sphi 0, %s31
      %s25 = sphi 0, %s23
      %s26 = sphi 0, %s24
      %s27 = sphi 0, %s25
      %s28 = sphi 0, %s26
      %s38 = sphi 0, %s40
      %s41 = sphi 0, %s38
      %s42 = sphi 0, %s41
      %s58 = sphi 0, %s42
      %s64 = sphi 0, %s66
      %s67 = sphi 0, %s64
      %s68 = sphi 0, %s67
      %s84 = sphi 0, %s68
      %s90 = sphi 0, %s92
      %s93 = sphi 0, %s90
      %s94 = sphi 0, %s93
      %s110 = sphi 0, %s94
      %s118 = sphi 0, %s120
      %s121 = sphi 0, %s118
      %s122 = sphi 0, %s121
      %s138 = sphi 0, %s122
    $region4: #{tpu_custom_call.1} parent=1 // loop_header_branch
      %19 = sbr.rel (%p17) target = $region8
    $region5: #{tpu_custom_call.1} parent=1 // loop_body
      %s21 = ssub.s32 %s16, 1
      %s22 = ssub.s32 %s16, 2
      %s29 = sadd.s32 1, %s24
      %p30 = scmp.ge.s32.totalorder %s29, 4
      %s31 = scalar_select %p30, 0, %s29
      %s32 = sadd.s32 1, %s23
      %s33 = scalar_select %p30, %s32, %s23
      %p34 = scmp.ge.s32.totalorder %s33, 1
      %s35 = scalar_select %p34, 0, %s33
      %s36 = ssub.s32 %s23, %s35
      %p37 = scmp.eq.s32.totalorder %s36, 0
      %s39 = sadd.s32 %s38, 1
      %s40 = scalar_select %p37, %s38, %s39
      %p43 = pneg %p37
      %p44 = scmp.eq.s32.totalorder %s16, 3
      %p45 = por %p43, %p44
      %p46 = scmp.ne.s32.totalorder %s38, %s41
      %p47 = scmp.eq.s32.totalorder %s16, 0
      %p48 = por %p46, %p47
      %p49 = scmp.ne.s32.totalorder %s38, %s41
      %p50 = scmp.eq.s32.totalorder %s21, 3
      %p51 = por %p49, %p50
      %p52 = scmp.ne.s32.totalorder %s41, %s42
      %p53 = scmp.eq.s32.totalorder %s21, 0
      %p54 = por %p52, %p53
      %p55 = scmp.ne.s32.totalorder %s41, %s42
      %p56 = scmp.eq.s32.totalorder %s22, 3
      %p57 = por %p55, %p56
      %p59 = scmp.ne.s32.totalorder %s42, %s58
      %p60 = scmp.eq.s32.totalorder %s22, 0
      %p61 = por %p59, %p60
      %s62 = ssub.s32 %s24, %s31
      %p63 = scmp.eq.s32.totalorder %s62, 0
      %s65 = sadd.s32 %s64, 1
      %s66 = scalar_select %p63, %s64, %s65
      %p69 = pneg %p63
      %p70 = scmp.eq.s32.totalorder %s16, 3
      %p71 = por %p69, %p70
      %p72 = scmp.ne.s32.totalorder %s64, %s67
      %p73 = scmp.eq.s32.totalorder %s16, 0
      %p74 = por %p72, %p73
      %p75 = scmp.ne.s32.totalorder %s64, %s67
      %p76 = scmp.eq.s32.totalorder %s21, 3
      %p77 = por %p75, %p76
      %p78 = scmp.ne.s32.totalorder %s67, %s68
      %p79 = scmp.eq.s32.totalorder %s21, 0
      %p80 = por %p78, %p79
      %p81 = scmp.ne.s32.totalorder %s67, %s68
      %p82 = scmp.eq.s32.totalorder %s22, 3
      %p83 = por %p81, %p82
      %p85 = scmp.ne.s32.totalorder %s68, %s84
      %p86 = scmp.eq.s32.totalorder %s22, 0
      %p87 = por %p85, %p86
      %s88 = ssub.s32 %s24, %s31
      %p89 = scmp.eq.s32.totalorder %s88, 0
      %s91 = sadd.s32 %s90, 1
      %s92 = scalar_select %p89, %s90, %s91
      %p95 = pneg %p89
      %p96 = scmp.eq.s32.totalorder %s16, 3
      %p97 = por %p95, %p96
      %p98 = scmp.ne.s32.totalorder %s90, %s93
      %p99 = scmp.eq.s32.totalorder %s16, 0
      %p100 = por %p98, %p99
      %p101 = scmp.ne.s32.totalorder %s90, %s93
      %p102 = scmp.eq.s32.totalorder %s21, 3
      %p103 = por %p101, %p102
      %p104 = scmp.ne.s32.totalorder %s93, %s94
      %p105 = scmp.eq.s32.totalorder %s21, 0
      %p106 = por %p104, %p105
      %p107 = scmp.ne.s32.totalorder %s93, %s94
      %p108 = scmp.eq.s32.totalorder %s22, 3
      %p109 = por %p107, %p108
      %p111 = scmp.ne.s32.totalorder %s94, %s110
      %p112 = scmp.eq.s32.totalorder %s22, 0
      %p113 = por %p111, %p112
      %s114 = ssub.s32 %s23, %s35
      %s115 = ssub.s32 %s24, %s31
      %s116 = sor.u32 %s114, %s115
      %p117 = scmp.eq.s32.totalorder %s116, 0
      %s119 = sadd.s32 %s118, 1
      %s120 = scalar_select %p117, %s118, %s119
      %p123 = pneg %p117
      %p124 = scmp.eq.s32.totalorder %s16, 3
      %p125 = por %p123, %p124
      %p126 = scmp.ne.s32.totalorder %s118, %s121
      %p127 = scmp.eq.s32.totalorder %s16, 0
      %p128 = por %p126, %p127
      %p129 = scmp.ne.s32.totalorder %s118, %s121
      %p130 = scmp.eq.s32.totalorder %s21, 3
      %p131 = por %p129, %p130
      %p132 = scmp.ne.s32.totalorder %s121, %s122
      %p133 = scmp.eq.s32.totalorder %s21, 0
      %p134 = por %p132, %p133
      %p135 = scmp.ne.s32.totalorder %s121, %s122
      %p136 = scmp.eq.s32.totalorder %s22, 3
      %p137 = por %p135, %p136
      %p139 = scmp.ne.s32.totalorder %s122, %s138
      %p140 = scmp.eq.s32.totalorder %s22, 0
      %p141 = por %p139, %p140
      %p142 = scmp.le.s32.totalorder 1, %s16
      %p143 = scmp.lt.s32.totalorder %s16, 5
      %p144 = pnand %p142, %p143
      %p145 = pneg %p144
      // Predicated region
      $region9: #{tpu_custom_call.1} parent=5 // pred_check
        _
      $region10: #{tpu_custom_call.1} parent=5 // pred_check_branch
        %147 = sbr.rel (%p144) target = $region12
      $region11: #{tpu_custom_call.1} parent=5 // pred_region
        %s148 = ssub.s32 %s16, 1
        // Predicated region
        $region13: #{tpu_custom_call.1} parent=11 // pred_check
          %p149 = pneg %p54
        $region14: #{tpu_custom_call.1} parent=11 // pred_check_branch
          %151 = sbr.rel (%p149) target = $region16
        $region15: #{tpu_custom_call.1} parent=11 // pred_region
          %s152 = smul.u32 2, %s25
          %154 = vsyncadd [#allocation3], 0
          %s155 = smul.addr %s152, 4
          %s156 = scalar_lea.hbm %s0, %s155
          %s157 = sshll.u32 %s156, 4
          %s158 = int_to_ptr.hbm [resolvable:$true] %s157
          %s159 = sshll.u32 [#allocation2], 4
          %s160 = int_to_ptr.vmem [resolvable:$true] %s159
          %165 = dma.hbm_to_vmem [thread:$0]  %s158, 128, %s160, [#allocation3], 64, 64, 4
        $region16: #{tpu_custom_call.1} parent=11 // pred_fallthru
          _
      $region12: #{tpu_custom_call.1} parent=5 // pred_fallthru
        _
      %p166 = scmp.lt.s32.totalorder %s16, 4
      // Predicated region
      $region17: #{tpu_custom_call.1} parent=5 // pred_check
        %p167 = pneg %p166
      $region18: #{tpu_custom_call.1} parent=5 // pred_check_branch
        %169 = sbr.rel (%p167) target = $region20
      $region19: #{tpu_custom_call.1} parent=5 // pred_region
        // Predicated region
        $region21: #{tpu_custom_call.1} parent=19 // pred_check
          %p170 = pneg %p74
        $region22: #{tpu_custom_call.1} parent=19 // pred_check_branch
          %172 = sbr.rel (%p170) target = $region24
        $region23: #{tpu_custom_call.1} parent=19 // pred_region
          %s173 = sand.u32 %s16, 1
          %s174 = scalar_lea.sflag [#allocation6], %s173
          %s175 = sand.u32 %s64, 1
          %s176 = smul.addr %s175, 32
          %s177 = scalar_lea.vmem [#allocation5], %s176
          %s178 = smul.u32 2, %s24
          %180 = vsyncadd %s174, 0
          %s181 = smul.addr %s178, 4
          %s182 = scalar_lea.hbm %s1, %s181
          %s183 = sshll.u32 %s182, 4
          %s184 = int_to_ptr.hbm [resolvable:$true] %s183
          %s185 = sshll.u32 %s177, 4
          %s186 = int_to_ptr.vmem [resolvable:$true] %s185
          %191 = dma.hbm_to_vmem [thread:$0]  %s184, 512, %s186, %s174, 512, 128, 8
        $region24: #{tpu_custom_call.1} parent=19 // pred_fallthru
          _
        // Predicated region
        $region25: #{tpu_custom_call.1} parent=19 // pred_check
          %p192 = pneg %p100
        $region26: #{tpu_custom_call.1} parent=19 // pred_check_branch
          %194 = sbr.rel (%p192) target = $region28
        $region27: #{tpu_custom_call.1} parent=19 // pred_region
          %s195 = sand.u32 %s16, 1
          %s196 = scalar_lea.sflag [#allocation6], %s195
          %s197 = sand.u32 %s90, 1
          %s198 = smul.addr %s197, 2
          %s199 = scalar_lea.vmem [#allocation7], %s198
          %s200 = smul.u32 2, %s24
          %202 = vsyncadd %s196, 0
          %s203 = scalar_lea.hbm %s2, %s200
          %s205 = sshll.u32 %s203, 4
          %s206 = int_to_ptr.hbm [resolvable:$true] %s205
          %s207 = sshll.u32 %s199, 4
          %s208 = int_to_ptr.vmem [resolvable:$true] %s207
          %210 = dma.hbm_to_vmem [thread:$0]  %s206, 32, %s208, %s196
        $region28: #{tpu_custom_call.1} parent=19 // pred_fallthru
          _
      $region20: #{tpu_custom_call.1} parent=5 // pred_fallthru
        _
      %p211 = scmp.le.s32.totalorder 1, %s16
      %p212 = scmp.lt.s32.totalorder %s16, 5
      %p213 = pnand %p211, %p212
      %p214 = pneg %p213
      // Predicated region
      $region29: #{tpu_custom_call.1} parent=5 // pred_check
        _
      $region30: #{tpu_custom_call.1} parent=5 // pred_check_branch
        %216 = sbr.rel (%p213) target = $region32
      $region31: #{tpu_custom_call.1} parent=5 // pred_region
        %s217 = ssub.s32 %s16, 1
        // Predicated region
        $region33: #{tpu_custom_call.1} parent=31 // pred_check
          %p218 = pneg %p54
        $region34: #{tpu_custom_call.1} parent=31 // pred_check_branch
          %220 = sbr.rel (%p218) target = $region36
        $region35: #{tpu_custom_call.1} parent=31 // pred_region
          %222 = dma.done [#allocation3], 128
        $region36: #{tpu_custom_call.1} parent=31 // pred_fallthru
          _
        %s223 = sand.u32 %s21, 1
        %s224 = scalar_lea.sflag [#allocation6], %s223
        %s225 = sand.u32 %s67, 1
        %s226 = smul.addr %s225, 32
        %s227 = scalar_lea.vmem [#allocation5], %s226
        // Predicated region
        $region37: #{tpu_custom_call.1} parent=31 // pred_check
          %p228 = pneg %p80
        $region38: #{tpu_custom_call.1} parent=31 // pred_check_branch
          %230 = sbr.rel (%p228) target = $region40
        $region39: #{tpu_custom_call.1} parent=31 // pred_region
          %232 = dma.done %s224, 512
        $region40: #{tpu_custom_call.1} parent=31 // pred_fallthru
          _
        %s233 = sand.u32 %s21, 1
        %s234 = scalar_lea.sflag [#allocation6], %s233
        %s235 = sand.u32 %s93, 1
        %s236 = smul.addr %s235, 2
        %s237 = scalar_lea.vmem [#allocation7], %s236
        // Predicated region
        $region41: #{tpu_custom_call.1} parent=31 // pred_check
          %p238 = pneg %p106
        $region42: #{tpu_custom_call.1} parent=31 // pred_check_branch
          %240 = sbr.rel (%p238) target = $region44
        $region43: #{tpu_custom_call.1} parent=31 // pred_region
          %242 = dma.done %s234, 32
        $region44: #{tpu_custom_call.1} parent=31 // pred_fallthru
          _
        %p243 = pneg %p54
        %p244 = pneg %p51
        %s245 = sand.u32 %s21, 1
        %s246 = scalar_lea.sflag [#allocation6], %s245
        %s247 = sand.u32 %s67, 1
        %s248 = smul.addr %s247, 32
        %s249 = scalar_lea.vmem [#allocation5], %s248
        %p250 = pneg %p80
        %p251 = pneg %p77
        %s252 = sand.u32 %s21, 1
        %s253 = scalar_lea.sflag [#allocation6], %s252
        %s254 = sand.u32 %s93, 1
        %s255 = smul.addr %s254, 2
        %s256 = scalar_lea.vmem [#allocation7], %s255
        %p257 = pneg %p106
        %p258 = pneg %p103
        %p259 = pneg %p134
        %p260 = pneg %p131
        %s261 = sand.u32 %s121, 1
        %s262 = scalar_lea.sflag [#allocation4], %s261
        %s263 = sand.u32 %s121, 1
        %s264 = smul.addr %s263, 32
        %s265 = scalar_lea.vmem [#allocation8], %s264
        %s266 = smul.u32 2, %s25
        %s267 = smul.u32 2, %s26
        %s268 = smul.u32 2, %s26
        %s269 = smul.u32 2, %s25
        %s270 = smul.u32 2, %s26
        %v272 = vld [vmem:[#allocation2] sm:$0xf]
        %v273 = vld [vmem:[#allocation2 + $0x4] sm:$0xf]
        %v274 = vld [vmem:[%s227] sm:$0xff]
        %v275 = vld [vmem:[%s227 + $0x8] sm:$0xff]
        %v276 = vld [vmem:[%s227 + $0x10] sm:$0xff]
        %v277 = vld [vmem:[%s227 + $0x18] sm:$0xff]
        %v278 = vld [vmem:[%s237] sm:$0x3]
        %v280 = vperm.slane %v278, 0
        %v281 = vperm.slane %v278, 1
        %v286 = vunpack.c.l.b16 %v272
        %v287 = vunpack.c.l.b16 %v273
        %v288 = vpack.c.b16 %v287, %v286
        %v293 = vunpack.c.l.b16 %v274
        %v294 = vunpack.c.h.b16 %v274
        %v295 = vunpack.c.l.b16 %v275
        %v296 = vunpack.c.h.b16 %v275
        %v297 = vunpack.c.l.b16 %v276
        %v298 = vunpack.c.h.b16 %v276
        %v299 = vunpack.c.l.b16 %v277
        %v300 = vunpack.c.h.b16 %v277
        %v301 = vpack.c.b16 %v295, %v293
        %v302 = vpack.c.b16 %v296, %v294
        %v303 = vpack.c.b16 %v299, %v297
        %v304 = vpack.c.b16 %v300, %v298
        %vm309 = vcmask 261120
        %v311 = vsel %vm309, %v288, 0
        %313 = vmatpush.bf16.msra.mxu0 0
        %314 = vmatpush.bf16.msra.mxu0 0
        %315 = vmatpush.bf16.msra.mxu0 0
        %316 = vmatpush.bf16.msra.mxu0 0
        %317 = vmatpush.bf16.msra.mxu0 0
        %318 = vmatpush.bf16.msra.mxu0 0
        %319 = vmatpush.bf16.msra.mxu0 %v303
        %320 = vmatpush.bf16.msra.mxu0 %v301
        %321 = vmatmul.bf16.gmra.mxu0 %v311
        %v322 = vpop.f32.mrf.mxu0
        %v323 = vadd.f32 %v280, %v322
        %v324 = vpop.f32.mrf.mxu0
        %v325 = vadd.f32 %v280, %v324
        %326 = vdwg.mxu0
        %327 = vmatpush.bf16.msra.mxu0 0
        %328 = vmatpush.bf16.msra.mxu0 0
        %329 = vmatpush.bf16.msra.mxu0 0
        %330 = vmatpush.bf16.msra.mxu0 0
        %331 = vmatpush.bf16.msra.mxu0 0
        %332 = vmatpush.bf16.msra.mxu0 0
        %333 = vmatpush.bf16.msra.mxu0 %v304
        %334 = vmatpush.bf16.msra.mxu0 %v302
        %335 = vmatmul.bf16.gmra.mxu0 %v311
        %v336 = vpop.f32.mrf.mxu0
        %v337 = vadd.f32 %v281, %v336
        %v338 = vpop.f32.mrf.mxu0
        %v339 = vadd.f32 %v281, %v338
        %340 = vdwg.mxu0
        %341 = vst [vmem:[%s265] sm:$0xff] %v323
        %342 = vst [vmem:[%s265 + $0x8] sm:$0xff] %v337
        %343 = vst [vmem:[%s265 + $0x10] sm:$0xff] %v325
        %344 = vst [vmem:[%s265 + $0x18] sm:$0xff] %v339
        %s345 = sand.u32 %s121, 1
        %s346 = scalar_lea.sflag [#allocation4], %s345
        %s347 = sand.u32 %s121, 1
        %s348 = smul.addr %s347, 32
        %s349 = scalar_lea.vmem [#allocation8], %s348
        // Predicated region
        $region45: #{tpu_custom_call.1} parent=31 // pred_check
          %p350 = pneg %p131
        $region46: #{tpu_custom_call.1} parent=31 // pred_check_branch
          %352 = sbr.rel (%p350) target = $region48
        $region47: #{tpu_custom_call.1} parent=31 // pred_region
          %s353 = smul.u32 2, %s25
          %s354 = smul.u32 2, %s26
          %356 = vsyncadd %s346, 0
          %s357 = smul.addr %s353, 8
          %s358 = sadd.s32 %s354, %s357
          %s359 = smul.addr %s358, 8
          %s360 = scalar_lea.hbm %s3, %s359
          %s361 = sshll.u32 %s349, 4
          %s362 = int_to_ptr.vmem [resolvable:$true] %s361
          %s363 = sshll.u32 %s360, 4
          %s364 = int_to_ptr.hbm [resolvable:$true] %s363
          %369 = dma.vmem_to_hbm [thread:$0]  %s362, 512, %s364, %s346, 256, 1024, 16
        $region48: #{tpu_custom_call.1} parent=31 // pred_fallthru
          _
      $region32: #{tpu_custom_call.1} parent=5 // pred_fallthru
        _
      %p370 = scmp.le.s32.totalorder 2, %s16
      // Predicated region
      $region49: #{tpu_custom_call.1} parent=5 // pred_check
        %p371 = pneg %p370
      $region50: #{tpu_custom_call.1} parent=5 // pred_check_branch
        %373 = sbr.rel (%p371) target = $region52
      $region51: #{tpu_custom_call.1} parent=5 // pred_region
        %s374 = ssub.s32 %s16, 2
        // Predicated region
        $region53: #{tpu_custom_call.1} parent=51 // pred_check
          %p375 = pneg %p137
        $region54: #{tpu_custom_call.1} parent=51 // pred_check_branch
          %377 = sbr.rel (%p375) target = $region56
        $region55: #{tpu_custom_call.1} parent=51 // pred_region
          %s378 = sand.u32 %s122, 1
          %s379 = scalar_lea.sflag [#allocation4], %s378
          %s380 = sand.u32 %s122, 1
          %s381 = smul.addr %s380, 32
          %s382 = scalar_lea.vmem [#allocation8], %s381
          %384 = dma.done %s379, 512
        $region56: #{tpu_custom_call.1} parent=51 // pred_fallthru
          _
      $region52: #{tpu_custom_call.1} parent=5 // pred_fallthru
        _
    $region6: #{tpu_custom_call.1} parent=1 // loop_footer
      %s20 = sadd.s32 1, %s16
    $region7: #{tpu_custom_call.1} parent=1 // loop_footer_branch
      %15 = sbr.rel target = $region3
    $region8: #{tpu_custom_call.1} parent=1 // loop_exit
      _
    %385 = vsyncpa [#allocation3], 1
    %s386 = scalar_lea.sflag [#allocation3], 1
    %387 = vsyncpa %s386, 1
    %388 = vsyncpa [#allocation6], 1
    %s389 = scalar_lea.sflag [#allocation6], 1
    %390 = vsyncpa %s389, 1
    %391 = vsyncpa [#allocation4], 1
    %s392 = scalar_lea.sflag [#allocation4], 1
    %393 = vsyncpa %s392, 1

</llo_original>
